<compile_context>
chip_gen: v7x
topology: tpu7x:2x2x1
jax: 0.10.0
libtpu: 0.0.40
codegen_flags: <defaults>
</compile_context>

<pallas_src>
import functools

import numpy as np

import jax
import jax.numpy as jnp
from jax.experimental import pallas as pl
from jax.experimental.pallas import tpu as pltpu


def _window_count_matrix(L: int, l_out: int, kernel_size: int, stride: int, pad: int):
    """A[t, j] = #taps of output window t that read x[:, j, :] (edge clamping folded in)."""
    t = np.arange(l_out, dtype=np.int64)[:, None]            # (L_out, 1)
    k = np.arange(kernel_size, dtype=np.int64)[None, :]      # (1, K)
    j = np.clip(t * stride + k - pad, 0, L - 1)              # (L_out, K) source index per tap
    a = np.zeros((l_out, L), dtype=np.float32)
    np.add.at(a, (np.broadcast_to(t, j.shape), j), 1.0)      # duplicates (edges) accumulate
    return a


def _moving_avg_kernel(a_ref, x_ref, o_ref, *, inv_k: float, precision):
    # a_ref: (L_out, L) integer window counts; x_ref: (Bt, L, Ct); o_ref: (Bt, L_out, Ct)
    a = a_ref[...]
    b_t = x_ref.shape[0]

    def one_batch(i):
        # (L_out, L) @ (L, Ct) on the MXU, f32 accumulation; scale by 1/K afterwards so the
        # count matrix stays exactly representable in bf16/f32.
        acc = jnp.dot(a, x_ref[i], preferred_element_type=jnp.float32, precision=precision)
        o_ref[i] = (acc * jnp.float32(inv_k)).astype(o_ref.dtype)

    if b_t <= 8:
        for i in range(b_t):          # static unroll (LLO scheduler visibility)
            one_batch(i)
    else:
        @pl.loop(0, b_t)
        def _(i):
            one_batch(i)


def _round_up(n: int, m: int) -> int:
    return -(-n // m) * m


def _block_vmem_bytes(b_t: int, L: int, l_out: int, c_t: int, elem: int, sub: int) -> int:
    """Padded VMEM footprint of one grid step (double-buffered in/out + A tile + f32 temps)."""
    c_pad = _round_up(c_t, 128)
    li = _round_up(L, sub)
    lo = _round_up(l_out, sub)
    per_batch = 2 * li * c_pad * elem + 2 * lo * c_pad * elem   # 2x buffered x and out blocks
    fixed = 2 * lo * _round_up(L, 128) * elem                   # 2x buffered A tile
    fixed += lo * c_pad * 4                                     # f32 dot result temporary
    return fixed + b_t * per_batch


def _largest_divisor_leq(n: int, cap: int) -> int:
    cap = max(1, min(n, cap))
    for d in range(cap, 0, -1):
        if n % d == 0:
            return d
    return 1


def moving_avg(x: jax.Array, kernel_size: int, stride: int) -> jax.Array:
    """x: (B, L, C) -> (B, L_out, C), matching the PyTorch moving_avg module."""
    B, L, C = x.shape
    pad = (kernel_size - 1) // 2
    l_out = (L + 2 * pad - kernel_size) // stride + 1
    elem = jnp.dtype(x.dtype).itemsize
    sub = 8 if elem >= 4 else (16 if elem == 2 else 32)

    # Generation-gated VMEM budget (64 MiB physical on v7x, 128 MiB on v5e/v6e).
    try:
        vmem_cap = int(pltpu.get_tpu_info().vmem_capacity_bytes)
    except Exception:
        vmem_cap = 64 * 1024 * 1024                  # conservative (v7x-safe) fallback
    vmem_limit = (3 * vmem_cap) // 4                 # 48 MiB on v7x, 96 MiB on v5e/v6e
    block_budget = (3 * vmem_limit) // 4             # headroom for compiler-internal scratch

    # Channel tile: lane-dense (multiple of 128) when possible, else the full channel axis.
    if C % 128 == 0:
        c_t = next((c for c in (512, 256, 128) if C % c == 0), 128)
    else:
        c_t = C                                      # lanes padded to 128; see NOTE in header.

    # Batch tile: largest divisor of B whose padded footprint fits the budget, while keeping
    # the input block in the few-MiB DMA sweet spot (amortizes ~0.35 us/grid-step overhead).
    c_pad = _round_up(c_t, 128)
    per_batch_in = _round_up(L, sub) * c_pad * elem
    fixed = _block_vmem_bytes(0, L, l_out, c_t, elem, sub)
    per_batch_tot = _block_vmem_bytes(1, L, l_out, c_t, elem, sub) - fixed
    cap_by_budget = max(1, (block_budget - fixed) // max(1, per_batch_tot))
    cap_by_dma = max(1, (8 * 1024 * 1024) // max(1, per_batch_in))
    b_t = _largest_divisor_leq(B, min(cap_by_budget, cap_by_dma))

    # v7x megacore: keep >= 2 parallel grid steps whenever the problem can be split.
    if (B // b_t) * (C // c_t) < 2:
        if B > 1:
            b_t = _largest_divisor_leq(B, B // 2)
        elif C % 256 == 0 and c_t == C:
            c_t = C // 2
    # TODO(synk): add time-axis (L) tiling with a 2*pad halo (element-offset index map or a
    # small manual DMA) for very long sequences where even a single-batch block would exceed
    # the VMEM budget; current blocks always carry the full time axis.

    grid = (B // b_t, C // c_t)

    counts = jnp.asarray(
        _window_count_matrix(L, l_out, kernel_size, stride, pad), dtype=x.dtype
    )
    precision = jax.lax.Precision.HIGHEST if x.dtype == jnp.float32 else None
    kernel = functools.partial(
        _moving_avg_kernel, inv_k=1.0 / kernel_size, precision=precision
    )

    flops = 2 * B * l_out * L * C + B * l_out * C
    bytes_accessed = (B * L * C + B * l_out * C + l_out * L) * elem

    return pl.pallas_call(
        kernel,
        out_shape=jax.ShapeDtypeStruct((B, l_out, C), x.dtype),
        grid_spec=pltpu.PrefetchScalarGridSpec(
            num_scalar_prefetch=0,
            grid=grid,
            in_specs=[
                pl.BlockSpec((l_out, L), lambda b, c: (0, 0)),       # constant A tile
                pl.BlockSpec((b_t, L, c_t), lambda b, c: (b, 0, c)),
            ],
            out_specs=pl.BlockSpec((b_t, l_out, c_t), lambda b, c: (b, 0, c)),
        ),
        compiler_params=pltpu.CompilerParams(
            dimension_semantics=("parallel", "parallel"),
            vmem_limit_bytes=vmem_limit,
        ),
        cost_estimate=pl.CostEstimate(
            flops=flops, transcendentals=0, bytes_accessed=bytes_accessed
        ),
    )(counts, x)


def _moving_avg_reference(x: jax.Array, kernel_size: int, stride: int) -> jax.Array:
    # Pure-JAX reference mirroring the PyTorch forward pass.
    pad = (kernel_size - 1) // 2
    front = jnp.repeat(x[:, 0:1, :], pad, axis=1)
    end = jnp.repeat(x[:, -1:, :], pad, axis=1)
    xp = jnp.concatenate([front, x, end], axis=1)
    l_out = (xp.shape[1] - kernel_size) // stride + 1
    windows = jnp.stack(
        [xp[:, t * stride: t * stride + kernel_size, :].mean(axis=1) for t in range(l_out)],
        axis=1,
    )
    return windows.astype(x.dtype)


if __name__ == "__main__":
    # Module config (no learned parameters in moving_avg).
    KERNEL_SIZE = 5
    STRIDE = 1

    # Small deterministic input: batch=2, seq=16, channels=32.
    key = jax.random.PRNGKey(0)
    x = jax.random.normal(key, (2, 16, 32), dtype=jnp.float32)

    out = jax.block_until_ready(moving_avg(x, KERNEL_SIZE, STRIDE))

    ref = _moving_avg_reference(x, KERNEL_SIZE, STRIDE)
    assert out.shape == ref.shape, (out.shape, ref.shape)
    assert jnp.allclose(out, ref, atol=1e-5, rtol=1e-5), "mismatch vs reference"

    print("KERNEL_OK")
</pallas_src>

<mosaic_0001>
module attributes {stable_mosaic.version = 11 : i64} {
  func.func @_moving_avg_kernel(%arg0: i32, %arg1: i32, %arg2: memref<16x16xf32, #tpu.memory_space<vmem>>, %arg3: memref<1x16x32xf32, #tpu.memory_space<vmem>>, %arg4: memref<1x16x32xf32, #tpu.memory_space<vmem>>) attributes {dimension_semantics = [#tpu.dimension_semantics<parallel>, #tpu.dimension_semantics<parallel>], iteration_bounds = array<i64: 2, 1>, scalar_prefetch = 0 : i64, scratch_operands = 0 : i64, tpu.core_type = #tpu.core_type<tc>, window_params = [{pipeline_mode = #tpu.pipeline_mode<synchronous>, transform_indices = @transform_0, window_bounds = array<i64: 16, 16>}, {transform_indices = @transform_1, window_bounds = array<i64: 1, 16, 32>}, {transform_indices = @transform_2, window_bounds = array<i64: 1, 16, 32>}]} {
    %c0 = arith.constant 0 : index
    %c0_0 = arith.constant 0 : index
    %0 = vector.load %arg2[%c0, %c0_0] : memref<16x16xf32, #tpu.memory_space<vmem>>, vector<16x16xf32>
    %c0_1 = arith.constant 0 : index
    %c0_2 = arith.constant 0 : index
    %c0_3 = arith.constant 0 : index
    %1 = vector.load %arg3[%c0_1, %c0_2, %c0_3] : memref<1x16x32xf32, #tpu.memory_space<vmem>>, vector<1x16x32xf32>
    %2 = vector.shape_cast %1 : vector<1x16x32xf32> to vector<16x32xf32>
    %cst = arith.constant dense<0.000000e+00> : vector<16x32xf32>
    %3 = tpu.matmul %0, %2, %cst {dimension_numbers = #tpu.dot_dimension_numbers<[1], [0], [0], [1], [0, 0, 1, 1], [], []>, precision = #tpu.contract_precision<fp32>} : vector<16x16xf32>, vector<16x32xf32>, vector<16x32xf32> -> vector<16x32xf32>
    %cst_4 = arith.constant 2.000000e-01 : f32
    %4 = vector.broadcast %cst_4 : f32 to vector<16x32xf32>
    %5 = arith.mulf %3, %4 : vector<16x32xf32>
    %c0_5 = arith.constant 0 : index
    %c0_6 = arith.constant 0 : index
    %c0_7 = arith.constant 0 : index
    %6 = vector.load %arg4[%c0_5, %c0_6, %c0_7] : memref<1x16x32xf32, #tpu.memory_space<vmem>>, vector<1x16x32xf32>
    %7 = vector.shape_cast %6 : vector<1x16x32xf32> to vector<16x32xf32>
    %8 = vector.shape_cast %5 : vector<16x32xf32> to vector<1x16x32xf32>
    tpu.vector_store %arg4[%c0_5, %c0_6, %c0_7], %8 {strides = array<i32>} : memref<1x16x32xf32, #tpu.memory_space<vmem>>, vector<1x16x32xf32>,
    return
  }
  func.func @transform_0(%arg0: i32, %arg1: i32) -> (i32, i32) {
    %c0_i32 = arith.constant 0 : i32
    %c0_i32_0 = arith.constant 0 : i32
    %c0_i32_1 = arith.constant 0 : i32
    return %c0_i32, %c0_i32_0 : i32, i32
  }
  func.func @transform_1(%arg0: i32, %arg1: i32) -> (i32, i32, i32) {
    %c0_i32 = arith.constant 0 : i32
    %c0_i32_0 = arith.constant 0 : i32
    return %arg0, %c0_i32, %arg1 : i32, i32, i32
  }
  func.func @transform_2(%arg0: i32, %arg1: i32) -> (i32, i32, i32) {
    %c0_i32 = arith.constant 0 : i32
    %c0_i32_0 = arith.constant 0 : i32
    return %arg0, %c0_i32, %arg1 : i32, i32, i32
  }
}

</mosaic_0001>

<llo_original>
// kernel: tpu_custom_call.1
$region0: #{tpu_custom_call.1}
  #allocation0 [shape = 'u32[]', space=smem, size = 0x4, offset = 0x4, fixed_abs, tag = 'smem constant byte address 0x4 - core index']
  #allocation1 [shape = 'u32[144,128]{1,0:T(1,128)}', space=vmem, size = 0x12000, scoped, tag = 'internal scratch']
  %s0 = inlined_call_operand.hbm [shape: f32[16,16], index: 0, kind: input, shape index: {}]
  %s1 = inlined_call_operand.hbm [shape: f32[2,16,32], index: 1, kind: input, shape index: {}]
  %s2 = inlined_call_operand.hbm [shape: f32[2,16,32], index: 2, kind: output, shape index: {}]
  %s3 = sld [smem:[#allocation0]]
  $region49: #{tpu_custom_call.1} parent=0
    _
  %s5 = ssub.s32 1, %s3
  %s6 = scalar_select 0, %s5, %s3
  $region1: #{tpu_custom_call.1} parent=0
    #allocation2 [shape = 'u8[8192]{0}', space=vmem, size = 0x2000, scoped, tag = 'input window, operand 0, single buffered']
    #allocation3 [shape = 's32[2]{0}', space=sflag, size = 0x8, scoped, tag = 'scoped memory for tpu_custom_call.1']
    #allocation4 [shape = 's32[2]{0}', space=sflag, size = 0x8, scoped, tag = 'scoped memory for tpu_custom_call.1']
    #allocation5 [shape = 'u8[16384]{0}', space=vmem, size = 0x4000, scoped, tag = 'input window, operand 1']
    #allocation6 [shape = 's32[2]{0}', space=sflag, size = 0x8, scoped, tag = 'scoped memory for tpu_custom_call.1']
    #allocation7 [shape = 'u8[16384]{0}', space=vmem, size = 0x4000, scoped, tag = 'output window, operand 0']
    %7 = vsyncpa [#allocation3], 0
    %8 = vsyncpa [#allocation6], 0
    %s9 = scalar_lea.sflag [#allocation6], 1
    %10 = vsyncpa %s9, 0
    %11 = vsyncpa [#allocation4], 0
    %s12 = scalar_lea.sflag [#allocation4], 1
    %13 = vsyncpa %s12, 0
    loop: start=0, step=1, limit=4
    $region2: #{tpu_custom_call.1} parent=1 // loop_pre_header
      _
    $region3: #{tpu_custom_call.1} parent=1 // loop_header
      %s15 = sphi 0, %s19
      %p16 = scmp.ge.s32.totalorder %s15, 4
      %s22 = sphi 0, %s34
      %s23 = sphi 0, %s30
      %s24 = sphi 0, %s22
      %s25 = sphi 0, %s23
      %s26 = sphi 0, %s24
      %s27 = sphi 0, %s25
      %s35 = sphi 0, %s35
      %s37 = sphi 0, %s35
      %s38 = sphi 0, %s37
      %s52 = sphi 0, %s38
      %s60 = sphi 0, %s62
      %s63 = sphi 0, %s60
      %s64 = sphi 0, %s63
      %s80 = sphi 0, %s64
      %s88 = sphi 0, %s90
      %s91 = sphi 0, %s88
      %s92 = sphi 0, %s91
      %s108 = sphi 0, %s92
    $region4: #{tpu_custom_call.1} parent=1 // loop_header_branch
      %18 = sbr.rel (%p16) target = $region8
    $region5: #{tpu_custom_call.1} parent=1 // loop_body
      %s20 = ssub.s32 %s15, 1
      %s21 = ssub.s32 %s15, 2
      %s28 = sadd.s32 1, %s23
      %p29 = scmp.ge.s32.totalorder %s28, 1
      %s30 = scalar_select %p29, 0, %s28
      %s31 = sadd.s32 1, %s22
      %s32 = scalar_select %p29, %s31, %s22
      %p33 = scmp.ge.s32.totalorder %s32, 2
      %s34 = scalar_select %p33, 0, %s32
      %s36 = sadd.s32 %s35, 1
      %p39 = scmp.eq.s32.totalorder %s15, 1
      %p40 = scmp.ne.s32.totalorder %s35, %s37
      %p41 = scmp.eq.s32.totalorder %s15, 0
      %p42 = por %p40, %p41
      %p43 = scmp.ne.s32.totalorder %s35, %s37
      %p44 = scmp.eq.s32.totalorder %s20, 1
      %p45 = por %p43, %p44
      %p46 = scmp.ne.s32.totalorder %s37, %s38
      %p47 = scmp.eq.s32.totalorder %s20, 0
      %p48 = por %p46, %p47
      %p49 = scmp.ne.s32.totalorder %s37, %s38
      %p50 = scmp.eq.s32.totalorder %s21, 1
      %p51 = por %p49, %p50
      %p53 = scmp.ne.s32.totalorder %s38, %s52
      %p54 = scmp.eq.s32.totalorder %s21, 0
      %p55 = por %p53, %p54
      %s56 = ssub.s32 %s22, %s34
      %s57 = ssub.s32 %s23, %s30
      %s58 = sor.u32 %s56, %s57
      %p59 = scmp.eq.s32.totalorder %s58, 0
      %s61 = sadd.s32 %s60, 1
      %s62 = scalar_select %p59, %s60, %s61
      %p65 = pneg %p59
      %p66 = scmp.eq.s32.totalorder %s15, 1
      %p67 = por %p65, %p66
      %p68 = scmp.ne.s32.totalorder %s60, %s63
      %p69 = scmp.eq.s32.totalorder %s15, 0
      %p70 = por %p68, %p69
      %p71 = scmp.ne.s32.totalorder %s60, %s63
      %p72 = scmp.eq.s32.totalorder %s20, 1
      %p73 = por %p71, %p72
      %p74 = scmp.ne.s32.totalorder %s63, %s64
      %p75 = scmp.eq.s32.totalorder %s20, 0
      %p76 = por %p74, %p75
      %p77 = scmp.ne.s32.totalorder %s63, %s64
      %p78 = scmp.eq.s32.totalorder %s21, 1
      %p79 = por %p77, %p78
      %p81 = scmp.ne.s32.totalorder %s64, %s80
      %p82 = scmp.eq.s32.totalorder %s21, 0
      %p83 = por %p81, %p82
      %s84 = ssub.s32 %s22, %s34
      %s85 = ssub.s32 %s23, %s30
      %s86 = sor.u32 %s84, %s85
      %p87 = scmp.eq.s32.totalorder %s86, 0
      %s89 = sadd.s32 %s88, 1
      %s90 = scalar_select %p87, %s88, %s89
      %p93 = pneg %p87
      %p94 = scmp.eq.s32.totalorder %s15, 1
      %p95 = por %p93, %p94
      %p96 = scmp.ne.s32.totalorder %s88, %s91
      %p97 = scmp.eq.s32.totalorder %s15, 0
      %p98 = por %p96, %p97
      %p99 = scmp.ne.s32.totalorder %s88, %s91
      %p100 = scmp.eq.s32.totalorder %s20, 1
      %p101 = por %p99, %p100
      %p102 = scmp.ne.s32.totalorder %s91, %s92
      %p103 = scmp.eq.s32.totalorder %s20, 0
      %p104 = por %p102, %p103
      %p105 = scmp.ne.s32.totalorder %s91, %s92
      %p106 = scmp.eq.s32.totalorder %s21, 1
      %p107 = por %p105, %p106
      %p109 = scmp.ne.s32.totalorder %s92, %s108
      %p110 = scmp.eq.s32.totalorder %s21, 0
      %p111 = por %p109, %p110
      %p112 = scmp.le.s32.totalorder 1, %s15
      %p113 = scmp.lt.s32.totalorder %s15, 3
      %p114 = pnand %p112, %p113
      %p115 = pneg %p114
      // Predicated region
      $region9: #{tpu_custom_call.1} parent=5 // pred_check
        _
      $region10: #{tpu_custom_call.1} parent=5 // pred_check_branch
        %117 = sbr.rel (%p114) target = $region12
      $region11: #{tpu_custom_call.1} parent=5 // pred_region
        %s118 = ssub.s32 %s15, 1
        // Predicated region
        $region13: #{tpu_custom_call.1} parent=11 // pred_check
          %p119 = pneg %p48
        $region14: #{tpu_custom_call.1} parent=11 // pred_check_branch
          %121 = sbr.rel (%p119) target = $region16
        $region15: #{tpu_custom_call.1} parent=11 // pred_region
          %s123 = ssub.s32 256, 256
          %124 = vsyncadd [#allocation3], %s123
          %s125 = sshll.u32 [#allocation2], 4
          %s126 = int_to_ptr.vmem [resolvable:$true] %s125
          %131 = dma.hbm_to_vmem [thread:$0]  %s0, 256, %s126, [#allocation3], 128, 128, 8
        $region16: #{tpu_custom_call.1} parent=11 // pred_fallthru
          _
      $region12: #{tpu_custom_call.1} parent=5 // pred_fallthru
        _
      %p132 = scmp.lt.s32.totalorder %s15, 2
      // Predicated region
      $region17: #{tpu_custom_call.1} parent=5 // pred_check
        %p133 = pneg %p132
      $region18: #{tpu_custom_call.1} parent=5 // pred_check_branch
        %135 = sbr.rel (%p133) target = $region20
      $region19: #{tpu_custom_call.1} parent=5 // pred_region
        // Predicated region
        $region21: #{tpu_custom_call.1} parent=19 // pred_check
          %p136 = pneg %p70
        $region22: #{tpu_custom_call.1} parent=19 // pred_check_branch
          %138 = sbr.rel (%p136) target = $region24
        $region23: #{tpu_custom_call.1} parent=19 // pred_region
          %s139 = sand.u32 %s60, 1
          %s140 = scalar_lea.sflag [#allocation6], %s139
          %s141 = sand.u32 %s60, 1
          %s142 = smul.addr %s141, 16
          %s143 = scalar_lea.vmem [#allocation5], %s142
          %s145 = ssub.s32 256, 256
          %146 = vsyncadd %s140, %s145
          %s147 = smul.addr %s22, 2
          %s148 = sadd.s32 %s23, %s147
          %s149 = smul.addr %s148, 128
          %s150 = scalar_lea.hbm %s1, %s149
          %s151 = sshll.u32 %s143, 4
          %s152 = int_to_ptr.vmem [resolvable:$true] %s151
          %157 = dma.hbm_to_vmem [thread:$0]  %s150, 256, %s152, %s140, 128, 128, 8
        $region24: #{tpu_custom_call.1} parent=19 // pred_fallthru
          _
      $region20: #{tpu_custom_call.1} parent=5 // pred_fallthru
        _
      %p158 = scmp.le.s32.totalorder 1, %s15
      %p159 = scmp.lt.s32.totalorder %s15, 3
      %p160 = pnand %p158, %p159
      %p161 = pneg %p160
      // Predicated region
      $region25: #{tpu_custom_call.1} parent=5 // pred_check
        _
      $region26: #{tpu_custom_call.1} parent=5 // pred_check_branch
        %163 = sbr.rel (%p160) target = $region28
      $region27: #{tpu_custom_call.1} parent=5 // pred_region
        %s164 = ssub.s32 %s15, 1
        // Predicated region
        $region29: #{tpu_custom_call.1} parent=27 // pred_check
          %p165 = pneg %p48
        $region30: #{tpu_custom_call.1} parent=27 // pred_check_branch
          %167 = sbr.rel (%p165) target = $region32
        $region31: #{tpu_custom_call.1} parent=27 // pred_region
          %168 = dma.done [#allocation3], 256
        $region32: #{tpu_custom_call.1} parent=27 // pred_fallthru
          _
        %s169 = sand.u32 %s63, 1
        %s170 = scalar_lea.sflag [#allocation6], %s169
        %s171 = sand.u32 %s63, 1
        %s172 = smul.addr %s171, 16
        %s173 = scalar_lea.vmem [#allocation5], %s172
        // Predicated region
        $region33: #{tpu_custom_call.1} parent=27 // pred_check
          %p174 = pneg %p76
        $region34: #{tpu_custom_call.1} parent=27 // pred_check_branch
          %176 = sbr.rel (%p174) target = $region36
        $region35: #{tpu_custom_call.1} parent=27 // pred_region
          %177 = dma.done %s170, 256
        $region36: #{tpu_custom_call.1} parent=27 // pred_fallthru
          _
        %p178 = pneg %p48
        %p179 = pneg %p45
        %s180 = sand.u32 %s63, 1
        %s181 = scalar_lea.sflag [#allocation6], %s180
        %s182 = sand.u32 %s63, 1
        %s183 = smul.addr %s182, 16
        %s184 = scalar_lea.vmem [#allocation5], %s183
        %p185 = pneg %p76
        %p186 = pneg %p73
        %p187 = pneg %p104
        %p188 = pneg %p101
        %s189 = sand.u32 %s91, 1
        %s190 = scalar_lea.sflag [#allocation4], %s189
        %s191 = sand.u32 %s91, 1
        %s192 = smul.addr %s191, 16
        %s193 = scalar_lea.vmem [#allocation7], %s192
        %v194 = vld [vmem:[#allocation2] sm:$0xff]
        %v195 = vld [vmem:[#allocation2 + $0x8] sm:$0xff]
        %v196 = vld [vmem:[%s173] sm:$0xff]
        %v197 = vld [vmem:[%s173 + $0x8] sm:$0xff]
        %vm198 = vcmask 130048
        %v200 = vsel %vm198, %v194, 0
        %v203 = vsel %vm198, %v195, 0
        %205 = vmatprep.subr.mxu0 0.0
        %v206 = vand.u32 %v196, 4294901760
        %207 = vmatpush1.msra.mxu0 %v206
        %208 = vmatprep.subr.mxu0 0.0
        %v209 = vand.u32 %v197, 4294901760
        %210 = vmatpush1.msra.mxu0 %v209
        %211 = vmatprep.subr.mxu0 0.0
        %212 = vmatpush1.msra.mxu0 0.0
        %213 = vmatprep.subr.mxu0 0.0
        %214 = vmatpush1.msra.mxu0 0.0
        %215 = vmatprep.subr.mxu0 0.0
        %216 = vmatpush1.msra.mxu0 0.0
        %217 = vmatprep.subr.mxu0 0.0
        %218 = vmatpush1.msra.mxu0 0.0
        %219 = vmatprep.subr.mxu0 0.0
        %220 = vmatpush1.msra.mxu0 0.0
        %221 = vmatprep.subr.mxu0 0.0
        %222 = vmatpush1.msra.mxu0 0.0
        %223 = vmatprep.subr.mxu0 0.0
        %224 = vmatpush1.msra.mxu0 0.0
        %225 = vmatprep.subr.mxu0 0.0
        %226 = vmatpush1.msra.mxu0 0.0
        %227 = vmatprep.subr.mxu0 0.0
        %228 = vmatpush1.msra.mxu0 0.0
        %229 = vmatprep.subr.mxu0 0.0
        %230 = vmatpush1.msra.mxu0 0.0
        %231 = vmatprep.subr.mxu0 0.0
        %232 = vmatpush1.msra.mxu0 0.0
        %233 = vmatprep.subr.mxu0 0.0
        %234 = vmatpush1.msra.mxu0 0.0
        %235 = vmatprep.subr.mxu0 0.0
        %236 = vmatpush1.msra.mxu0 0.0
        %237 = vmatprep.subr.mxu0 0.0
        %238 = vmatpush1.msra.mxu0 0.0
        %239 = vmatprep.subr.mxu0 0.0
        %240 = vmatpush1.msra.mxu0 0.0
        %241 = vmatprep.subr.mxu0 0.0
        %242 = vmatpush1.msra.mxu0 0.0
        %243 = vmatprep.subr.mxu0 0.0
        %244 = vmatpush1.msra.mxu0 0.0
        %245 = vmatprep.subr.mxu0 0.0
        %246 = vmatpush1.msra.mxu0 0.0
        %247 = vmatprep.subr.mxu0 0.0
        %248 = vmatpush1.msra.mxu0 0.0
        %249 = vmatprep.subr.mxu0 0.0
        %250 = vmatpush1.msra.mxu0 0.0
        %251 = vmatprep.subr.mxu0 0.0
        %252 = vmatpush1.msra.mxu0 0.0
        %253 = vmatprep.subr.mxu0 0.0
        %254 = vmatpush1.msra.mxu0 0.0
        %255 = vmatprep.subr.mxu0 0.0
        %256 = vmatpush1.msra.mxu0 0.0
        %257 = vmatprep.subr.mxu0 0.0
        %258 = vmatpush1.msra.mxu0 0.0
        %259 = vmatprep.subr.mxu0 0.0
        %260 = vmatpush1.msra.mxu0 0.0
        %261 = vmatprep.subr.mxu0 0.0
        %262 = vmatpush1.msra.mxu0 0.0
        %263 = vmatprep.subr.mxu0 0.0
        %264 = vmatpush1.msra.mxu0 0.0
        %265 = vmatprep.subr.mxu0 0.0
        %266 = vmatpush1.msra.mxu0 0.0
        %267 = vmatprep.subr.mxu0 0.0
        %268 = vmatpush1.msra.mxu0 0.0
        %269 = vmatprep.subr.mxu0 0.0
        %270 = vmatpush1.msra.mxu0 0.0
        %271 = vmatprep.mubr.f32.mxu0 0.0
        %v272 = vand.u32 %v200, 4294901760
        %v273 = vsub.f32 %v200, %v272
        %v274 = vand.u32 %v273, 4294901760
        %v275 = vsub.f32 %v273, %v274
        %v276 = vand.u32 %v275, 4294901760
        %277 = vmatmul.mubr.f32.gmra.mrb[0].mxu0 %v276
        %v278 = vpop.f32.mrb[0].mxu0
        %v279 = vadd.f32 0.0, %v278
        %v280 = vpop.f32.mrb[0].mxu0
        %281 = vmatprep.mubr.f32.mxu0 0.0
        %v282 = vand.u32 %v203, 4294901760
        %v283 = vsub.f32 %v203, %v282
        %v284 = vand.u32 %v283, 4294901760
        %v285 = vsub.f32 %v283, %v284
        %v286 = vand.u32 %v285, 4294901760
        %287 = vmatmul.mubr.f32.gmra.mrb[0].mxu0 %v286
        %v288 = vpop.f32.mrb[0].mxu0
        %v289 = vadd.f32 0.0, %v288
        %v290 = vpop.f32.mrb[0].mxu0
        %291 = vdwg.mxu0
        %292 = vmatprep.subr.mxu0 0.0
        %v293 = vand.u32 %v196, 4294901760
        %v294 = vsub.f32 %v196, %v293
        %v295 = vand.u32 %v294, 4294901760
        %v296 = vsub.f32 %v294, %v295
        %v297 = vand.u32 %v296, 4294901760
        %298 = vmatpush1.msra.mxu0 %v297
        %299 = vmatprep.subr.mxu0 0.0
        %v300 = vand.u32 %v197, 4294901760
        %v301 = vsub.f32 %v197, %v300
        %v302 = vand.u32 %v301, 4294901760
        %v303 = vsub.f32 %v301, %v302
        %v304 = vand.u32 %v303, 4294901760
        %305 = vmatpush1.msra.mxu0 %v304
        %306 = vmatprep.subr.mxu0 0.0
        %307 = vmatpush1.msra.mxu0 0.0
        %308 = vmatprep.subr.mxu0 0.0
        %309 = vmatpush1.msra.mxu0 0.0
        %310 = vmatprep.subr.mxu0 0.0
        %311 = vmatpush1.msra.mxu0 0.0
        %312 = vmatprep.subr.mxu0 0.0
        %313 = vmatpush1.msra.mxu0 0.0
        %314 = vmatprep.subr.mxu0 0.0
        %315 = vmatpush1.msra.mxu0 0.0
        %316 = vmatprep.subr.mxu0 0.0
        %317 = vmatpush1.msra.mxu0 0.0
        %318 = vmatprep.subr.mxu0 0.0
        %319 = vmatpush1.msra.mxu0 0.0
        %320 = vmatprep.subr.mxu0 0.0
        %321 = vmatpush1.msra.mxu0 0.0
        %322 = vmatprep.subr.mxu0 0.0
        %323 = vmatpush1.msra.mxu0 0.0
        %324 = vmatprep.subr.mxu0 0.0
        %325 = vmatpush1.msra.mxu0 0.0
        %326 = vmatprep.subr.mxu0 0.0
        %327 = vmatpush1.msra.mxu0 0.0
        %328 = vmatprep.subr.mxu0 0.0
        %329 = vmatpush1.msra.mxu0 0.0
        %330 = vmatprep.subr.mxu0 0.0
        %331 = vmatpush1.msra.mxu0 0.0
        %332 = vmatprep.subr.mxu0 0.0
        %333 = vmatpush1.msra.mxu0 0.0
        %334 = vmatprep.subr.mxu0 0.0
        %335 = vmatpush1.msra.mxu0 0.0
        %336 = vmatprep.subr.mxu0 0.0
        %337 = vmatpush1.msra.mxu0 0.0
        %338 = vmatprep.subr.mxu0 0.0
        %339 = vmatpush1.msra.mxu0 0.0
        %340 = vmatprep.subr.mxu0 0.0
        %341 = vmatpush1.msra.mxu0 0.0
        %342 = vmatprep.subr.mxu0 0.0
        %343 = vmatpush1.msra.mxu0 0.0
        %344 = vmatprep.subr.mxu0 0.0
        %345 = vmatpush1.msra.mxu0 0.0
        %346 = vmatprep.subr.mxu0 0.0
        %347 = vmatpush1.msra.mxu0 0.0
        %348 = vmatprep.subr.mxu0 0.0
        %349 = vmatpush1.msra.mxu0 0.0
        %350 = vmatprep.subr.mxu0 0.0
        %351 = vmatpush1.msra.mxu0 0.0
        %352 = vmatprep.subr.mxu0 0.0
        %353 = vmatpush1.msra.mxu0 0.0
        %354 = vmatprep.subr.mxu0 0.0
        %355 = vmatpush1.msra.mxu0 0.0
        %356 = vmatprep.subr.mxu0 0.0
        %357 = vmatpush1.msra.mxu0 0.0
        %358 = vmatprep.subr.mxu0 0.0
        %359 = vmatpush1.msra.mxu0 0.0
        %360 = vmatprep.subr.mxu0 0.0
        %361 = vmatpush1.msra.mxu0 0.0
        %362 = vmatprep.subr.mxu0 0.0
        %363 = vmatpush1.msra.mxu0 0.0
        %364 = vmatprep.subr.mxu0 0.0
        %365 = vmatpush1.msra.mxu0 0.0
        %366 = vmatprep.mubr.f32.mxu0 0.0
        %v367 = vand.u32 %v200, 4294901760
        %368 = vmatmul.mubr.f32.gmra.mrb[0].mxu0 %v367
        %v369 = vpop.f32.mrb[0].mxu0
        %v370 = vadd.f32 %v279, %v369
        %v371 = vpop.f32.mrb[0].mxu0
        %372 = vmatprep.mubr.f32.mxu0 0.0
        %v373 = vand.u32 %v203, 4294901760
        %374 = vmatmul.mubr.f32.gmra.mrb[0].mxu0 %v373
        %v375 = vpop.f32.mrb[0].mxu0
        %v376 = vadd.f32 %v289, %v375
        %v377 = vpop.f32.mrb[0].mxu0
        %378 = vdwg.mxu0
        %379 = vmatprep.subr.mxu0 0.0
        %v380 = vand.u32 %v196, 4294901760
        %v381 = vsub.f32 %v196, %v380
        %382 = vmatpush1.msra.mxu0 %v381
        %383 = vmatprep.subr.mxu0 0.0
        %v384 = vand.u32 %v197, 4294901760
        %v385 = vsub.f32 %v197, %v384
        %386 = vmatpush1.msra.mxu0 %v385
        %387 = vmatprep.subr.mxu0 0.0
        %388 = vmatpush1.msra.mxu0 0.0
        %389 = vmatprep.subr.mxu0 0.0
        %390 = vmatpush1.msra.mxu0 0.0
        %391 = vmatprep.subr.mxu0 0.0
        %392 = vmatpush1.msra.mxu0 0.0
        %393 = vmatprep.subr.mxu0 0.0
        %394 = vmatpush1.msra.mxu0 0.0
        %395 = vmatprep.subr.mxu0 0.0
        %396 = vmatpush1.msra.mxu0 0.0
        %397 = vmatprep.subr.mxu0 0.0
        %398 = vmatpush1.msra.mxu0 0.0
        %399 = vmatprep.subr.mxu0 0.0
        %400 = vmatpush1.msra.mxu0 0.0
        %401 = vmatprep.subr.mxu0 0.0
        %402 = vmatpush1.msra.mxu0 0.0
        %403 = vmatprep.subr.mxu0 0.0
        %404 = vmatpush1.msra.mxu0 0.0
        %405 = vmatprep.subr.mxu0 0.0
        %406 = vmatpush1.msra.mxu0 0.0
        %407 = vmatprep.subr.mxu0 0.0
        %408 = vmatpush1.msra.mxu0 0.0
        %409 = vmatprep.subr.mxu0 0.0
        %410 = vmatpush1.msra.mxu0 0.0
        %411 = vmatprep.subr.mxu0 0.0
        %412 = vmatpush1.msra.mxu0 0.0
        %413 = vmatprep.subr.mxu0 0.0
        %414 = vmatpush1.msra.mxu0 0.0
        %415 = vmatprep.subr.mxu0 0.0
        %416 = vmatpush1.msra.mxu0 0.0
        %417 = vmatprep.subr.mxu0 0.0
        %418 = vmatpush1.msra.mxu0 0.0
        %419 = vmatprep.subr.mxu0 0.0
        %420 = vmatpush1.msra.mxu0 0.0
        %421 = vmatprep.subr.mxu0 0.0
        %422 = vmatpush1.msra.mxu0 0.0
        %423 = vmatprep.subr.mxu0 0.0
        %424 = vmatpush1.msra.mxu0 0.0
        %425 = vmatprep.subr.mxu0 0.0
        %426 = vmatpush1.msra.mxu0 0.0
        %427 = vmatprep.subr.mxu0 0.0
        %428 = vmatpush1.msra.mxu0 0.0
        %429 = vmatprep.subr.mxu0 0.0
        %430 = vmatpush1.msra.mxu0 0.0
        %431 = vmatprep.subr.mxu0 0.0
        %432 = vmatpush1.msra.mxu0 0.0
        %433 = vmatprep.subr.mxu0 0.0
        %434 = vmatpush1.msra.mxu0 0.0
        %435 = vmatprep.subr.mxu0 0.0
        %436 = vmatpush1.msra.mxu0 0.0
        %437 = vmatprep.subr.mxu0 0.0
        %438 = vmatpush1.msra.mxu0 0.0
        %439 = vmatprep.subr.mxu0 0.0
        %440 = vmatpush1.msra.mxu0 0.0
        %441 = vmatprep.subr.mxu0 0.0
        %442 = vmatpush1.msra.mxu0 0.0
        %443 = vmatprep.subr.mxu0 0.0
        %444 = vmatpush1.msra.mxu0 0.0
        %445 = vmatprep.subr.mxu0 0.0
        %446 = vmatpush1.msra.mxu0 0.0
        %447 = vmatprep.mubr.f32.mxu0 0.0
        %v448 = vand.u32 %v200, 4294901760
        %v449 = vsub.f32 %v200, %v448
        %450 = vmatmul.mubr.f32.gmra.mrb[0].mxu0 %v449
        %v451 = vpop.f32.mrb[0].mxu0
        %v452 = vadd.f32 %v370, %v451
        %v453 = vpop.f32.mrb[0].mxu0
        %454 = vmatprep.mubr.f32.mxu0 0.0
        %v455 = vand.u32 %v203, 4294901760
        %v456 = vsub.f32 %v203, %v455
        %457 = vmatmul.mubr.f32.gmra.mrb[0].mxu0 %v456
        %v458 = vpop.f32.mrb[0].mxu0
        %v459 = vadd.f32 %v376, %v458
        %v460 = vpop.f32.mrb[0].mxu0
        %461 = vdwg.mxu0
        %462 = vmatprep.subr.mxu0 0.0
        %v463 = vand.u32 %v196, 4294901760
        %464 = vmatpush1.msra.mxu0 %v463
        %465 = vmatprep.subr.mxu0 0.0
        %v466 = vand.u32 %v197, 4294901760
        %467 = vmatpush1.msra.mxu0 %v466
        %468 = vmatprep.subr.mxu0 0.0
        %469 = vmatpush1.msra.mxu0 0.0
        %470 = vmatprep.subr.mxu0 0.0
        %471 = vmatpush1.msra.mxu0 0.0
        %472 = vmatprep.subr.mxu0 0.0
        %473 = vmatpush1.msra.mxu0 0.0
        %474 = vmatprep.subr.mxu0 0.0
        %475 = vmatpush1.msra.mxu0 0.0
        %476 = vmatprep.subr.mxu0 0.0
        %477 = vmatpush1.msra.mxu0 0.0
        %478 = vmatprep.subr.mxu0 0.0
        %479 = vmatpush1.msra.mxu0 0.0
        %480 = vmatprep.subr.mxu0 0.0
        %481 = vmatpush1.msra.mxu0 0.0
        %482 = vmatprep.subr.mxu0 0.0
        %483 = vmatpush1.msra.mxu0 0.0
        %484 = vmatprep.subr.mxu0 0.0
        %485 = vmatpush1.msra.mxu0 0.0
        %486 = vmatprep.subr.mxu0 0.0
        %487 = vmatpush1.msra.mxu0 0.0
        %488 = vmatprep.subr.mxu0 0.0
        %489 = vmatpush1.msra.mxu0 0.0
        %490 = vmatprep.subr.mxu0 0.0
        %491 = vmatpush1.msra.mxu0 0.0
        %492 = vmatprep.subr.mxu0 0.0
        %493 = vmatpush1.msra.mxu0 0.0
        %494 = vmatprep.subr.mxu0 0.0
        %495 = vmatpush1.msra.mxu0 0.0
        %496 = vmatprep.subr.mxu0 0.0
        %497 = vmatpush1.msra.mxu0 0.0
        %498 = vmatprep.subr.mxu0 0.0
        %499 = vmatpush1.msra.mxu0 0.0
        %500 = vmatprep.subr.mxu0 0.0
        %501 = vmatpush1.msra.mxu0 0.0
        %502 = vmatprep.subr.mxu0 0.0
        %503 = vmatpush1.msra.mxu0 0.0
        %504 = vmatprep.subr.mxu0 0.0
        %505 = vmatpush1.msra.mxu0 0.0
        %506 = vmatprep.subr.mxu0 0.0
        %507 = vmatpush1.msra.mxu0 0.0
        %508 = vmatprep.subr.mxu0 0.0
        %509 = vmatpush1.msra.mxu0 0.0
        %510 = vmatprep.subr.mxu0 0.0
        %511 = vmatpush1.msra.mxu0 0.0
        %512 = vmatprep.subr.mxu0 0.0
        %513 = vmatpush1.msra.mxu0 0.0
        %514 = vmatprep.subr.mxu0 0.0
        %515 = vmatpush1.msra.mxu0 0.0
        %516 = vmatprep.subr.mxu0 0.0
        %517 = vmatpush1.msra.mxu0 0.0
        %518 = vmatprep.subr.mxu0 0.0
        %519 = vmatpush1.msra.mxu0 0.0
        %520 = vmatprep.subr.mxu0 0.0
        %521 = vmatpush1.msra.mxu0 0.0
        %522 = vmatprep.subr.mxu0 0.0
        %523 = vmatpush1.msra.mxu0 0.0
        %524 = vmatprep.subr.mxu0 0.0
        %525 = vmatpush1.msra.mxu0 0.0
        %526 = vmatprep.subr.mxu0 0.0
        %527 = vmatpush1.msra.mxu0 0.0
        %528 = vmatprep.mubr.f32.mxu0 0.0
        %v529 = vand.u32 %v200, 4294901760
        %v530 = vsub.f32 %v200, %v529
        %v531 = vand.u32 %v530, 4294901760
        %532 = vmatmul.mubr.f32.gmra.mrb[0].mxu0 %v531
        %v533 = vpop.f32.mrb[0].mxu0
        %v534 = vadd.f32 %v452, %v533
        %v535 = vpop.f32.mrb[0].mxu0
        %536 = vmatprep.mubr.f32.mxu0 0.0
        %v537 = vand.u32 %v203, 4294901760
        %v538 = vsub.f32 %v203, %v537
        %v539 = vand.u32 %v538, 4294901760
        %540 = vmatmul.mubr.f32.gmra.mrb[0].mxu0 %v539
        %v541 = vpop.f32.mrb[0].mxu0
        %v542 = vadd.f32 %v459, %v541
        %v543 = vpop.f32.mrb[0].mxu0
        %544 = vdwg.mxu0
        %545 = vmatprep.subr.mxu0 0.0
        %v546 = vand.u32 %v196, 4294901760
        %v547 = vsub.f32 %v196, %v546
        %v548 = vand.u32 %v547, 4294901760
        %549 = vmatpush1.msra.mxu0 %v548
        %550 = vmatprep.subr.mxu0 0.0
        %v551 = vand.u32 %v197, 4294901760
        %v552 = vsub.f32 %v197, %v551
        %v553 = vand.u32 %v552, 4294901760
        %554 = vmatpush1.msra.mxu0 %v553
        %555 = vmatprep.subr.mxu0 0.0
        %556 = vmatpush1.msra.mxu0 0.0
        %557 = vmatprep.subr.mxu0 0.0
        %558 = vmatpush1.msra.mxu0 0.0
        %559 = vmatprep.subr.mxu0 0.0
        %560 = vmatpush1.msra.mxu0 0.0
        %561 = vmatprep.subr.mxu0 0.0
        %562 = vmatpush1.msra.mxu0 0.0
        %563 = vmatprep.subr.mxu0 0.0
        %564 = vmatpush1.msra.mxu0 0.0
        %565 = vmatprep.subr.mxu0 0.0
        %566 = vmatpush1.msra.mxu0 0.0
        %567 = vmatprep.subr.mxu0 0.0
        %568 = vmatpush1.msra.mxu0 0.0
        %569 = vmatprep.subr.mxu0 0.0
        %570 = vmatpush1.msra.mxu0 0.0
        %571 = vmatprep.subr.mxu0 0.0
        %572 = vmatpush1.msra.mxu0 0.0
        %573 = vmatprep.subr.mxu0 0.0
        %574 = vmatpush1.msra.mxu0 0.0
        %575 = vmatprep.subr.mxu0 0.0
        %576 = vmatpush1.msra.mxu0 0.0
        %577 = vmatprep.subr.mxu0 0.0
        %578 = vmatpush1.msra.mxu0 0.0
        %579 = vmatprep.subr.mxu0 0.0
        %580 = vmatpush1.msra.mxu0 0.0
        %581 = vmatprep.subr.mxu0 0.0
        %582 = vmatpush1.msra.mxu0 0.0
        %583 = vmatprep.subr.mxu0 0.0
        %584 = vmatpush1.msra.mxu0 0.0
        %585 = vmatprep.subr.mxu0 0.0
        %586 = vmatpush1.msra.mxu0 0.0
        %587 = vmatprep.subr.mxu0 0.0
        %588 = vmatpush1.msra.mxu0 0.0
        %589 = vmatprep.subr.mxu0 0.0
        %590 = vmatpush1.msra.mxu0 0.0
        %591 = vmatprep.subr.mxu0 0.0
        %592 = vmatpush1.msra.mxu0 0.0
        %593 = vmatprep.subr.mxu0 0.0
        %594 = vmatpush1.msra.mxu0 0.0
        %595 = vmatprep.subr.mxu0 0.0
        %596 = vmatpush1.msra.mxu0 0.0
        %597 = vmatprep.subr.mxu0 0.0
        %598 = vmatpush1.msra.mxu0 0.0
        %599 = vmatprep.subr.mxu0 0.0
        %600 = vmatpush1.msra.mxu0 0.0
        %601 = vmatprep.subr.mxu0 0.0
        %602 = vmatpush1.msra.mxu0 0.0
        %603 = vmatprep.subr.mxu0 0.0
        %604 = vmatpush1.msra.mxu0 0.0
        %605 = vmatprep.subr.mxu0 0.0
        %606 = vmatpush1.msra.mxu0 0.0
        %607 = vmatprep.subr.mxu0 0.0
        %608 = vmatpush1.msra.mxu0 0.0
        %609 = vmatprep.subr.mxu0 0.0
        %610 = vmatpush1.msra.mxu0 0.0
        %611 = vmatprep.subr.mxu0 0.0
        %612 = vmatpush1.msra.mxu0 0.0
        %613 = vmatprep.subr.mxu0 0.0
        %614 = vmatpush1.msra.mxu0 0.0
        %615 = vmatprep.mubr.f32.mxu0 0.0
        %v616 = vand.u32 %v200, 4294901760
        %617 = vmatmul.mubr.f32.gmra.mrb[0].mxu0 %v616
        %v618 = vpop.f32.mrb[0].mxu0
        %v619 = vadd.f32 %v534, %v618
        %v620 = vpop.f32.mrb[0].mxu0
        %621 = vmatprep.mubr.f32.mxu0 0.0
        %v622 = vand.u32 %v203, 4294901760
        %623 = vmatmul.mubr.f32.gmra.mrb[0].mxu0 %v622
        %v624 = vpop.f32.mrb[0].mxu0
        %v625 = vadd.f32 %v542, %v624
        %v626 = vpop.f32.mrb[0].mxu0
        %627 = vdwg.mxu0
        %628 = vmatprep.subr.mxu0 0.0
        %v629 = vand.u32 %v196, 4294901760
        %630 = vmatpush1.msra.mxu0 %v629
        %631 = vmatprep.subr.mxu0 0.0
        %v632 = vand.u32 %v197, 4294901760
        %633 = vmatpush1.msra.mxu0 %v632
        %634 = vmatprep.subr.mxu0 0.0
        %635 = vmatpush1.msra.mxu0 0.0
        %636 = vmatprep.subr.mxu0 0.0
        %637 = vmatpush1.msra.mxu0 0.0
        %638 = vmatprep.subr.mxu0 0.0
        %639 = vmatpush1.msra.mxu0 0.0
        %640 = vmatprep.subr.mxu0 0.0
        %641 = vmatpush1.msra.mxu0 0.0
        %642 = vmatprep.subr.mxu0 0.0
        %643 = vmatpush1.msra.mxu0 0.0
        %644 = vmatprep.subr.mxu0 0.0
        %645 = vmatpush1.msra.mxu0 0.0
        %646 = vmatprep.subr.mxu0 0.0
        %647 = vmatpush1.msra.mxu0 0.0
        %648 = vmatprep.subr.mxu0 0.0
        %649 = vmatpush1.msra.mxu0 0.0
        %650 = vmatprep.subr.mxu0 0.0
        %651 = vmatpush1.msra.mxu0 0.0
        %652 = vmatprep.subr.mxu0 0.0
        %653 = vmatpush1.msra.mxu0 0.0
        %654 = vmatprep.subr.mxu0 0.0
        %655 = vmatpush1.msra.mxu0 0.0
        %656 = vmatprep.subr.mxu0 0.0
        %657 = vmatpush1.msra.mxu0 0.0
        %658 = vmatprep.subr.mxu0 0.0
        %659 = vmatpush1.msra.mxu0 0.0
        %660 = vmatprep.subr.mxu0 0.0
        %661 = vmatpush1.msra.mxu0 0.0
        %662 = vmatprep.subr.mxu0 0.0
        %663 = vmatpush1.msra.mxu0 0.0
        %664 = vmatprep.subr.mxu0 0.0
        %665 = vmatpush1.msra.mxu0 0.0
        %666 = vmatprep.subr.mxu0 0.0
        %667 = vmatpush1.msra.mxu0 0.0
        %668 = vmatprep.subr.mxu0 0.0
        %669 = vmatpush1.msra.mxu0 0.0
        %670 = vmatprep.subr.mxu0 0.0
        %671 = vmatpush1.msra.mxu0 0.0
        %672 = vmatprep.subr.mxu0 0.0
        %673 = vmatpush1.msra.mxu0 0.0
        %674 = vmatprep.subr.mxu0 0.0
        %675 = vmatpush1.msra.mxu0 0.0
        %676 = vmatprep.subr.mxu0 0.0
        %677 = vmatpush1.msra.mxu0 0.0
        %678 = vmatprep.subr.mxu0 0.0
        %679 = vmatpush1.msra.mxu0 0.0
        %680 = vmatprep.subr.mxu0 0.0
        %681 = vmatpush1.msra.mxu0 0.0
        %682 = vmatprep.subr.mxu0 0.0
        %683 = vmatpush1.msra.mxu0 0.0
        %684 = vmatprep.subr.mxu0 0.0
        %685 = vmatpush1.msra.mxu0 0.0
        %686 = vmatprep.subr.mxu0 0.0
        %687 = vmatpush1.msra.mxu0 0.0
        %688 = vmatprep.subr.mxu0 0.0
        %689 = vmatpush1.msra.mxu0 0.0
        %690 = vmatprep.subr.mxu0 0.0
        %691 = vmatpush1.msra.mxu0 0.0
        %692 = vmatprep.subr.mxu0 0.0
        %693 = vmatpush1.msra.mxu0 0.0
        %694 = vmatprep.mubr.f32.mxu0 0.0
        %v695 = vand.u32 %v200, 4294901760
        %696 = vmatmul.mubr.f32.gmra.mrb[0].mxu0 %v695
        %v697 = vpop.f32.mrb[0].mxu0
        %v698 = vadd.f32 %v619, %v697
        %v699 = vpop.f32.mrb[0].mxu0
        %700 = vmatprep.mubr.f32.mxu0 0.0
        %v701 = vand.u32 %v203, 4294901760
        %702 = vmatmul.mubr.f32.gmra.mrb[0].mxu0 %v701
        %v703 = vpop.f32.mrb[0].mxu0
        %v704 = vadd.f32 %v625, %v703
        %v705 = vpop.f32.mrb[0].mxu0
        %706 = vdwg.mxu0
        %v707 = vmul.f32 %v698, 0.2
        %v708 = vmul.f32 %v704, 0.2
        %vm709 = vcmask 261120
        %710 = vst.msk [vmem:[%s193] sm:$0xff] %vm709, %v707
        %711 = vst.msk [vmem:[%s193 + $0x8] sm:$0xff] %vm709, %v708
        %s712 = sand.u32 %s91, 1
        %s713 = scalar_lea.sflag [#allocation4], %s712
        %s714 = sand.u32 %s91, 1
        %s715 = smul.addr %s714, 16
        %s716 = scalar_lea.vmem [#allocation7], %s715
        // Predicated region
        $region37: #{tpu_custom_call.1} parent=27 // pred_check
          %p717 = pneg %p101
        $region38: #{tpu_custom_call.1} parent=27 // pred_check_branch
          %719 = sbr.rel (%p717) target = $region40
        $region39: #{tpu_custom_call.1} parent=27 // pred_region
          %s721 = ssub.s32 256, 256
          %722 = vsyncadd %s713, %s721
          %s723 = smul.addr %s24, 2
          %s724 = sadd.s32 %s25, %s723
          %s725 = smul.addr %s724, 128
          %s726 = scalar_lea.hbm %s2, %s725
          %s727 = sshll.u32 %s716, 4
          %s728 = int_to_ptr.vmem [resolvable:$true] %s727
          %733 = dma.vmem_to_hbm [thread:$0]  %s728, 256, %s726, %s713, 128, 128, 8
        $region40: #{tpu_custom_call.1} parent=27 // pred_fallthru
          _
      $region28: #{tpu_custom_call.1} parent=5 // pred_fallthru
        _
      %p734 = scmp.le.s32.totalorder 2, %s15
      // Predicated region
      $region41: #{tpu_custom_call.1} parent=5 // pred_check
        %p735 = pneg %p734
      $region42: #{tpu_custom_call.1} parent=5 // pred_check_branch
        %737 = sbr.rel (%p735) target = $region44
      $region43: #{tpu_custom_call.1} parent=5 // pred_region
        %s738 = ssub.s32 %s15, 2
        // Predicated region
        $region45: #{tpu_custom_call.1} parent=43 // pred_check
          %p739 = pneg %p107
        $region46: #{tpu_custom_call.1} parent=43 // pred_check_branch
          %741 = sbr.rel (%p739) target = $region48
        $region47: #{tpu_custom_call.1} parent=43 // pred_region
          %s742 = sand.u32 %s92, 1
          %s743 = scalar_lea.sflag [#allocation4], %s742
          %s744 = sand.u32 %s92, 1
          %s745 = smul.addr %s744, 16
          %s746 = scalar_lea.vmem [#allocation7], %s745
          %747 = dma.done %s743, 256
        $region48: #{tpu_custom_call.1} parent=43 // pred_fallthru
          _
      $region44: #{tpu_custom_call.1} parent=5 // pred_fallthru
        _
    $region6: #{tpu_custom_call.1} parent=1 // loop_footer
      %s19 = sadd.s32 1, %s15
    $region7: #{tpu_custom_call.1} parent=1 // loop_footer_branch
      %14 = sbr.rel target = $region3
    $region8: #{tpu_custom_call.1} parent=1 // loop_exit
      _
    %748 = vsyncpa [#allocation3], 1
    %s749 = scalar_lea.sflag [#allocation3], 1
    %750 = vsyncpa %s749, 1
    %751 = vsyncpa [#allocation6], 1
    %s752 = scalar_lea.sflag [#allocation6], 1
    %753 = vsyncpa %s752, 1
    %754 = vsyncpa [#allocation4], 1
    %s755 = scalar_lea.sflag [#allocation4], 1
    %756 = vsyncpa %s755, 1

</llo_original>
